<compile_context>
chip_gen: v5e
topology: v5e:2x2
jax: 0.10.0
libtpu: 0.0.40
codegen_flags: <defaults>
</compile_context>

<pallas_src>
import jax
import jax.numpy as jnp
from jax.experimental import pallas as pl
from jax.experimental.pallas import tpu as pltpu

NUM_FEATURES = 520
NUM_CLASSES = 3
H1, H2, H3 = 256, 128, 64
OUT_PAD = 128          # lane-dense padded output width (>= NUM_CLASSES)


def mlp_kernel(x_ref,
               w1_ref, b1_ref,
               w2_ref, b2_ref,
               w3_ref, b3_ref,
               w4_ref, b4_ref,
               out_ref):
    """Fused 4-layer MLP forward for one batch tile; weights resident in VMEM."""
    # In-kernel f32 -> bf16 cast (cheap VPU op; avoids an extra HBM round trip).
    h = x_ref[...].astype(jnp.bfloat16)                          # (tb, 520)

    h = jnp.dot(h, w1_ref[...], preferred_element_type=jnp.float32)
    h = jnp.maximum(h + b1_ref[...], 0.0)                        # bias + ReLU in f32
    # dropout(p=0.3): identity in eval mode
    h = h.astype(jnp.bfloat16)

    h = jnp.dot(h, w2_ref[...], preferred_element_type=jnp.float32)
    h = jnp.maximum(h + b2_ref[...], 0.0)
    # dropout(p=0.3): identity in eval mode
    h = h.astype(jnp.bfloat16)

    h = jnp.dot(h, w3_ref[...], preferred_element_type=jnp.float32)
    h = jnp.maximum(h + b3_ref[...], 0.0)
    h = h.astype(jnp.bfloat16)

    logits = (jnp.dot(h, w4_ref[...], preferred_element_type=jnp.float32)
              + b4_ref[...])                                     # (tb, OUT_PAD) f32
    out_ref[...] = logits.astype(out_ref.dtype)                  # bf16 writeback


def _round_up(n, m):
    return ((n + m - 1) // m) * m


def deep_nn_forward(x, kparams, *, batch_tile=1024):
    """x: (B, 520) float32 -> (B, 3) float32. kparams from prepare_params()."""
    (w1, b1), (w2, b2), (w3, b3), (w4, b4) = kparams
    B, F = x.shape
    assert F == NUM_FEATURES

    if B <= batch_tile:
        # Single grid step; 16-row granularity matches bf16 sublane packing.
        tb = _round_up(B, 16)
    else:
        tb = batch_tile
    Bp = _round_up(B, tb)
    grid = (Bp // tb,)

    x_in = x.astype(jnp.float32)
    if Bp != B:
        # Only taken when B is not a multiple of tb (never for the small-B path).
        x_in = jnp.pad(x_in, ((0, Bp - B), (0, 0)))

    def full(arr):
        # block == full array -> trivially satisfies the (8,128) rule and is
        # grid-invariant (fetched once, stays resident in VMEM).
        return pl.BlockSpec(arr.shape, lambda i: (0,) * arr.ndim)

    out = pl.pallas_call(
        mlp_kernel,
        out_shape=jax.ShapeDtypeStruct((Bp, OUT_PAD), jnp.bfloat16),
        grid_spec=pltpu.PrefetchScalarGridSpec(
            num_scalar_prefetch=0,
            grid=grid,
            in_specs=[
                pl.BlockSpec((tb, NUM_FEATURES), lambda i: (i, 0)),  # x tile (f32)
                full(w1), full(b1),
                full(w2), full(b2),
                full(w3), full(b3),
                full(w4), full(b4),
            ],
            out_specs=pl.BlockSpec((tb, OUT_PAD), lambda i: (i, 0)),
        ),
        compiler_params=pltpu.CompilerParams(
            dimension_semantics=("parallel",)),
    )(x_in, w1, b1, w2, b2, w3, b3, w4, b4)

    return out[:B, :NUM_CLASSES].astype(jnp.float32)


def init_params(key):
    """Deterministic synthetic f32 parameters; weights stored as [in, out]."""
    dims = [(NUM_FEATURES, H1), (H1, H2), (H2, H3), (H3, NUM_CLASSES)]
    params = []
    for din, dout in dims:
        kw, kb, key = jax.random.split(key, 3)
        scale = 1.0 / jnp.sqrt(jnp.float32(din))   # ~ PyTorch Linear default range
        w = jax.random.uniform(kw, (din, dout), jnp.float32, -scale, scale)
        b = jax.random.uniform(kb, (1, dout), jnp.float32, -scale, scale)
        params.append((w, b))
    return params


def prepare_params(params):
    """Cast weights to bf16 and zero-pad the last layer to OUT_PAD lanes."""
    (w1, b1), (w2, b2), (w3, b3), (w4, b4) = params
    w4p = jnp.zeros((H3, OUT_PAD), jnp.float32).at[:, :NUM_CLASSES].set(w4)
    b4p = jnp.zeros((1, OUT_PAD), jnp.float32).at[:, :NUM_CLASSES].set(b4)
    bf = lambda w: w.astype(jnp.bfloat16)
    return ((bf(w1), b1), (bf(w2), b2), (bf(w3), b3), (bf(w4p), b4p))


def ref_forward(x, kparams):
    """Pure-JAX reference of the same math (bf16 operands, f32 acc, bf16 logits)."""
    (w1, b1), (w2, b2), (w3, b3), (w4, b4) = kparams
    h = x.astype(jnp.bfloat16)
    h = jnp.maximum(jnp.dot(h, w1, preferred_element_type=jnp.float32) + b1, 0.0)
    h = jnp.maximum(jnp.dot(h.astype(jnp.bfloat16), w2,
                            preferred_element_type=jnp.float32) + b2, 0.0)
    h = jnp.maximum(jnp.dot(h.astype(jnp.bfloat16), w3,
                            preferred_element_type=jnp.float32) + b3, 0.0)
    out = jnp.dot(h.astype(jnp.bfloat16), w4,
                  preferred_element_type=jnp.float32) + b4
    out = out.astype(jnp.bfloat16).astype(jnp.float32)   # match bf16 writeback
    return out[:, :NUM_CLASSES]


if __name__ == "__main__":
    key = jax.random.PRNGKey(0)
    kx, kp = jax.random.split(key)

    batch = 16
    x = jax.random.normal(kx, (batch, NUM_FEATURES), jnp.float32)
    kparams = prepare_params(init_params(kp))

    out = deep_nn_forward(x, kparams)          # B=16 -> tb=16, grid=(1,), no pad
    out = jax.block_until_ready(out)

    expected = ref_forward(x, kparams)
    assert out.shape == (batch, NUM_CLASSES)
    assert jnp.allclose(out, expected, atol=2e-2, rtol=2e-2), "mismatch vs reference"

    print("KERNEL_OK")
</pallas_src>

<mosaic_0001>
module attributes {stable_mosaic.version = 11 : i64} {
  func.func @mlp_kernel(%arg0: i32, %arg1: memref<16x520xf32, #tpu.memory_space<vmem>>, %arg2: memref<520x256xbf16, #tpu.memory_space<vmem>>, %arg3: memref<1x256xf32, #tpu.memory_space<vmem>>, %arg4: memref<256x128xbf16, #tpu.memory_space<vmem>>, %arg5: memref<1x128xf32, #tpu.memory_space<vmem>>, %arg6: memref<128x64xbf16, #tpu.memory_space<vmem>>, %arg7: memref<1x64xf32, #tpu.memory_space<vmem>>, %arg8: memref<64x128xbf16, #tpu.memory_space<vmem>>, %arg9: memref<1x128xf32, #tpu.memory_space<vmem>>, %arg10: memref<16x128xbf16, #tpu.memory_space<vmem>>) attributes {dimension_semantics = [#tpu.dimension_semantics<parallel>], iteration_bounds = array<i64: 1>, scalar_prefetch = 0 : i64, scratch_operands = 0 : i64, tpu.core_type = #tpu.core_type<tc>, window_params = [{transform_indices = @transform_0, window_bounds = array<i64: 16, 520>}, {pipeline_mode = #tpu.pipeline_mode<synchronous>, transform_indices = @transform_1, window_bounds = array<i64: 520, 256>}, {pipeline_mode = #tpu.pipeline_mode<synchronous>, transform_indices = @transform_2, window_bounds = array<i64: 1, 256>}, {pipeline_mode = #tpu.pipeline_mode<synchronous>, transform_indices = @transform_3, window_bounds = array<i64: 256, 128>}, {pipeline_mode = #tpu.pipeline_mode<synchronous>, transform_indices = @transform_4, window_bounds = array<i64: 1, 128>}, {pipeline_mode = #tpu.pipeline_mode<synchronous>, transform_indices = @transform_5, window_bounds = array<i64: 128, 64>}, {pipeline_mode = #tpu.pipeline_mode<synchronous>, transform_indices = @transform_6, window_bounds = array<i64: 1, 64>}, {pipeline_mode = #tpu.pipeline_mode<synchronous>, transform_indices = @transform_7, window_bounds = array<i64: 64, 128>}, {pipeline_mode = #tpu.pipeline_mode<synchronous>, transform_indices = @transform_8, window_bounds = array<i64: 1, 128>}, {transform_indices = @transform_9, window_bounds = array<i64: 16, 128>}]} {
    %c0 = arith.constant 0 : index
    %c0_0 = arith.constant 0 : index
    %0 = vector.load %arg1[%c0, %c0_0] : memref<16x520xf32, #tpu.memory_space<vmem>>, vector<16x520xf32>
    %1 = arith.truncf %0 : vector<16x520xf32> to vector<16x520xbf16>
    %c0_1 = arith.constant 0 : index
    %c0_2 = arith.constant 0 : index
    %2 = vector.load %arg2[%c0_1, %c0_2] : memref<520x256xbf16, #tpu.memory_space<vmem>>, vector<520x256xbf16>
    %cst = arith.constant dense<0.000000e+00> : vector<16x256xf32>
    %3 = tpu.matmul %1, %2, %cst {dimension_numbers = #tpu.dot_dimension_numbers<[1], [0], [0], [1], [0, 0, 1, 1], [], []>} : vector<16x520xbf16>, vector<520x256xbf16>, vector<16x256xf32> -> vector<16x256xf32>
    %c0_3 = arith.constant 0 : index
    %c0_4 = arith.constant 0 : index
    %4 = vector.load %arg3[%c0_3, %c0_4] : memref<1x256xf32, #tpu.memory_space<vmem>>, vector<1x256xf32>
    %5 = vector.broadcast %4 : vector<1x256xf32> to vector<16x256xf32>
    %6 = arith.addf %3, %5 : vector<16x256xf32>
    %cst_5 = arith.constant 0.000000e+00 : f32
    %7 = vector.broadcast %cst_5 : f32 to vector<16x256xf32>
    %8 = arith.maximumf %6, %7 : vector<16x256xf32>
    %9 = arith.truncf %8 : vector<16x256xf32> to vector<16x256xbf16>
    %c0_6 = arith.constant 0 : index
    %c0_7 = arith.constant 0 : index
    %10 = vector.load %arg4[%c0_6, %c0_7] : memref<256x128xbf16, #tpu.memory_space<vmem>>, vector<256x128xbf16>
    %cst_8 = arith.constant dense<0.000000e+00> : vector<16x128xf32>
    %11 = tpu.matmul %9, %10, %cst_8 {dimension_numbers = #tpu.dot_dimension_numbers<[1], [0], [0], [1], [0, 0, 1, 1], [], []>} : vector<16x256xbf16>, vector<256x128xbf16>, vector<16x128xf32> -> vector<16x128xf32>
    %c0_9 = arith.constant 0 : index
    %c0_10 = arith.constant 0 : index
    %12 = vector.load %arg5[%c0_9, %c0_10] : memref<1x128xf32, #tpu.memory_space<vmem>>, vector<1x128xf32>
    %13 = vector.broadcast %12 : vector<1x128xf32> to vector<16x128xf32>
    %14 = arith.addf %11, %13 : vector<16x128xf32>
    %cst_11 = arith.constant 0.000000e+00 : f32
    %15 = vector.broadcast %cst_11 : f32 to vector<16x128xf32>
    %16 = arith.maximumf %14, %15 : vector<16x128xf32>
    %17 = arith.truncf %16 : vector<16x128xf32> to vector<16x128xbf16>
    %c0_12 = arith.constant 0 : index
    %c0_13 = arith.constant 0 : index
    %18 = vector.load %arg6[%c0_12, %c0_13] : memref<128x64xbf16, #tpu.memory_space<vmem>>, vector<128x64xbf16>
    %cst_14 = arith.constant dense<0.000000e+00> : vector<16x64xf32>
    %19 = tpu.matmul %17, %18, %cst_14 {dimension_numbers = #tpu.dot_dimension_numbers<[1], [0], [0], [1], [0, 0, 1, 1], [], []>} : vector<16x128xbf16>, vector<128x64xbf16>, vector<16x64xf32> -> vector<16x64xf32>
    %c0_15 = arith.constant 0 : index
    %c0_16 = arith.constant 0 : index
    %20 = vector.load %arg7[%c0_15, %c0_16] : memref<1x64xf32, #tpu.memory_space<vmem>>, vector<1x64xf32>
    %21 = vector.broadcast %20 : vector<1x64xf32> to vector<16x64xf32>
    %22 = arith.addf %19, %21 : vector<16x64xf32>
    %cst_17 = arith.constant 0.000000e+00 : f32
    %23 = vector.broadcast %cst_17 : f32 to vector<16x64xf32>
    %24 = arith.maximumf %22, %23 : vector<16x64xf32>
    %25 = arith.truncf %24 : vector<16x64xf32> to vector<16x64xbf16>
    %c0_18 = arith.constant 0 : index
    %c0_19 = arith.constant 0 : index
    %26 = vector.load %arg8[%c0_18, %c0_19] : memref<64x128xbf16, #tpu.memory_space<vmem>>, vector<64x128xbf16>
    %cst_20 = arith.constant dense<0.000000e+00> : vector<16x128xf32>
    %27 = tpu.matmul %25, %26, %cst_20 {dimension_numbers = #tpu.dot_dimension_numbers<[1], [0], [0], [1], [0, 0, 1, 1], [], []>} : vector<16x64xbf16>, vector<64x128xbf16>, vector<16x128xf32> -> vector<16x128xf32>
    %c0_21 = arith.constant 0 : index
    %c0_22 = arith.constant 0 : index
    %28 = vector.load %arg9[%c0_21, %c0_22] : memref<1x128xf32, #tpu.memory_space<vmem>>, vector<1x128xf32>
    %29 = vector.broadcast %28 : vector<1x128xf32> to vector<16x128xf32>
    %30 = arith.addf %27, %29 : vector<16x128xf32>
    %31 = arith.truncf %30 : vector<16x128xf32> to vector<16x128xbf16>
    %c0_23 = arith.constant 0 : index
    %c0_24 = arith.constant 0 : index
    %32 = vector.load %arg10[%c0_23, %c0_24] : memref<16x128xbf16, #tpu.memory_space<vmem>>, vector<16x128xbf16>
    tpu.vector_store %arg10[%c0_23, %c0_24], %31 {strides = array<i32>} : memref<16x128xbf16, #tpu.memory_space<vmem>>, vector<16x128xbf16>,
    return
  }
  func.func @transform_0(%arg0: i32) -> (i32, i32) {
    %c0_i32 = arith.constant 0 : i32
    %c0_i32_0 = arith.constant 0 : i32
    return %arg0, %c0_i32 : i32, i32
  }
  func.func @transform_1(%arg0: i32) -> (i32, i32) {
    %c0_i32 = arith.constant 0 : i32
    %c0_i32_0 = arith.constant 0 : i32
    %c0_i32_1 = arith.constant 0 : i32
    return %c0_i32, %c0_i32_0 : i32, i32
  }
  func.func @transform_2(%arg0: i32) -> (i32, i32) {
    %c0_i32 = arith.constant 0 : i32
    %c0_i32_0 = arith.constant 0 : i32
    %c0_i32_1 = arith.constant 0 : i32
    return %c0_i32, %c0_i32_0 : i32, i32
  }
  func.func @transform_3(%arg0: i32) -> (i32, i32) {
    %c0_i32 = arith.constant 0 : i32
    %c0_i32_0 = arith.constant 0 : i32
    %c0_i32_1 = arith.constant 0 : i32
    return %c0_i32, %c0_i32_0 : i32, i32
  }
  func.func @transform_4(%arg0: i32) -> (i32, i32) {
    %c0_i32 = arith.constant 0 : i32
    %c0_i32_0 = arith.constant 0 : i32
    %c0_i32_1 = arith.constant 0 : i32
    return %c0_i32, %c0_i32_0 : i32, i32
  }
  func.func @transform_5(%arg0: i32) -> (i32, i32) {
    %c0_i32 = arith.constant 0 : i32
    %c0_i32_0 = arith.constant 0 : i32
    %c0_i32_1 = arith.constant 0 : i32
    return %c0_i32, %c0_i32_0 : i32, i32
  }
  func.func @transform_6(%arg0: i32) -> (i32, i32) {
    %c0_i32 = arith.constant 0 : i32
    %c0_i32_0 = arith.constant 0 : i32
    %c0_i32_1 = arith.constant 0 : i32
    return %c0_i32, %c0_i32_0 : i32, i32
  }
  func.func @transform_7(%arg0: i32) -> (i32, i32) {
    %c0_i32 = arith.constant 0 : i32
    %c0_i32_0 = arith.constant 0 : i32
    %c0_i32_1 = arith.constant 0 : i32
    return %c0_i32, %c0_i32_0 : i32, i32
  }
  func.func @transform_8(%arg0: i32) -> (i32, i32) {
    %c0_i32 = arith.constant 0 : i32
    %c0_i32_0 = arith.constant 0 : i32
    %c0_i32_1 = arith.constant 0 : i32
    return %c0_i32, %c0_i32_0 : i32, i32
  }
  func.func @transform_9(%arg0: i32) -> (i32, i32) {
    %c0_i32 = arith.constant 0 : i32
    %c0_i32_0 = arith.constant 0 : i32
    return %arg0, %c0_i32 : i32, i32
  }
}

</mosaic_0001>

<llo_original>
// kernel: tpu_custom_call.1
$region0: #{tpu_custom_call.1}
  #allocation0 [shape = 'u32[]', space=smem, size = 0x4, offset = 0x4, fixed_abs, tag = 'smem constant byte address 0x4 - core index']
  #allocation1 [shape = 'u32[72,128]{1,0:T(1,128)}', space=vmem, size = 0x9000, scoped, tag = 'internal scratch']
  %s0 = inlined_call_operand.vmem [shape: f32[16,520], index: 0, kind: input, shape index: {}]
  %s1 = inlined_call_operand.hbm [shape: bf16[520,256], index: 1, kind: input, shape index: {}]
  %s2 = inlined_call_operand.vmem [shape: f32[1,256], index: 2, kind: input, shape index: {}]
  %s3 = inlined_call_operand.hbm [shape: bf16[256,128], index: 3, kind: input, shape index: {}]
  %s4 = inlined_call_operand.vmem [shape: f32[1,128], index: 4, kind: input, shape index: {}]
  %s5 = inlined_call_operand.vmem [shape: bf16[128,64], index: 5, kind: input, shape index: {}]
  %s6 = inlined_call_operand.vmem [shape: f32[1,64], index: 6, kind: input, shape index: {}]
  %s7 = inlined_call_operand.hbm [shape: bf16[64,128], index: 7, kind: input, shape index: {}]
  %s8 = inlined_call_operand.vmem [shape: f32[1,128], index: 8, kind: input, shape index: {}]
  %s9 = inlined_call_operand.hbm [shape: bf16[16,128], index: 9, kind: output, shape index: {}]
  %s10 = sld [smem:[#allocation0]]
  $region58: #{tpu_custom_call.1} parent=0
    _
  %s12 = ssub.s32 1, %s10
  %s13 = scalar_select 0, %s12, %s10
  $region1: #{tpu_custom_call.1} parent=0
    #allocation2 [shape = 'u8[266240]{0}', space=vmem, size = 0x41000, scoped, tag = 'input window, operand 1, single buffered']
    #allocation3 [shape = 's32[1]{0}', space=sflag, size = 0x4, scoped, tag = 'scoped memory for tpu_custom_call.1']
    #allocation4 [shape = 's32[1]{0}', space=sflag, size = 0x4, scoped, tag = 'scoped memory for tpu_custom_call.1']
    #allocation5 [shape = 'u8[65536]{0}', space=vmem, size = 0x10000, scoped, tag = 'input window, operand 3, single buffered']
    #allocation6 [shape = 's32[1]{0}', space=sflag, size = 0x4, scoped, tag = 'scoped memory for tpu_custom_call.1']
    #allocation7 [shape = 'u8[16384]{0}', space=vmem, size = 0x4000, scoped, tag = 'input window, operand 7, single buffered']
    #allocation8 [shape = 'u8[4096]{0}', space=vmem, size = 0x1000, scoped, tag = 'output window, operand 0, single buffered']
    %14 = vsyncpa [#allocation3], 0
    %15 = vsyncpa [#allocation6], 0
    %16 = vsyncpa [#allocation4], 0
    // Predicated region
    $region2: #{tpu_custom_call.1} parent=1 // pred_check
      _
    $region3: #{tpu_custom_call.1} parent=1 // pred_check_branch
      %18 = sbr.rel (0) target = $region5
    $region4: #{tpu_custom_call.1} parent=1 // pred_region
      _
    $region5: #{tpu_custom_call.1} parent=1 // pred_fallthru
      _
    // Predicated region
    $region6: #{tpu_custom_call.1} parent=1 // pred_check
      _
    $region7: #{tpu_custom_call.1} parent=1 // pred_check_branch
      %20 = sbr.rel (0) target = $region9
    $region8: #{tpu_custom_call.1} parent=1 // pred_region
      %22 = vsyncadd [#allocation3], 0
      %s23 = sshll.u32 %s1, 4
      %s24 = int_to_ptr.hbm [resolvable:$true] %s23
      %s25 = sshll.u32 [#allocation2], 4
      %s26 = int_to_ptr.vmem [resolvable:$true] %s25
      %31 = dma.hbm_to_vmem [thread:$0]  %s24, 8320, %s26, [#allocation3], 128, 128, 8
    $region9: #{tpu_custom_call.1} parent=1 // pred_fallthru
      _
    // Predicated region
    $region10: #{tpu_custom_call.1} parent=1 // pred_check
      _
    $region11: #{tpu_custom_call.1} parent=1 // pred_check_branch
      %33 = sbr.rel (0) target = $region13
    $region12: #{tpu_custom_call.1} parent=1 // pred_region
      _
    $region13: #{tpu_custom_call.1} parent=1 // pred_fallthru
      _
    // Predicated region
    $region14: #{tpu_custom_call.1} parent=1 // pred_check
      _
    $region15: #{tpu_custom_call.1} parent=1 // pred_check_branch
      %35 = sbr.rel (0) target = $region17
    $region16: #{tpu_custom_call.1} parent=1 // pred_region
      %37 = vsyncadd [#allocation6], 0
      %s38 = sshll.u32 %s3, 4
      %s39 = int_to_ptr.hbm [resolvable:$true] %s38
      %s40 = sshll.u32 [#allocation5], 4
      %s41 = int_to_ptr.vmem [resolvable:$true] %s40
      %46 = dma.hbm_to_vmem [thread:$0]  %s39, 2048, %s41, [#allocation6], 64, 64, 4
    $region17: #{tpu_custom_call.1} parent=1 // pred_fallthru
      _
    // Predicated region
    $region18: #{tpu_custom_call.1} parent=1 // pred_check
      _
    $region19: #{tpu_custom_call.1} parent=1 // pred_check_branch
      %48 = sbr.rel (0) target = $region21
    $region20: #{tpu_custom_call.1} parent=1 // pred_region
      _
    $region21: #{tpu_custom_call.1} parent=1 // pred_fallthru
      _
    // Predicated region
    $region22: #{tpu_custom_call.1} parent=1 // pred_check
      _
    $region23: #{tpu_custom_call.1} parent=1 // pred_check_branch
      %50 = sbr.rel (0) target = $region25
    $region24: #{tpu_custom_call.1} parent=1 // pred_region
      _
    $region25: #{tpu_custom_call.1} parent=1 // pred_fallthru
      _
    // Predicated region
    $region26: #{tpu_custom_call.1} parent=1 // pred_check
      _
    $region27: #{tpu_custom_call.1} parent=1 // pred_check_branch
      %52 = sbr.rel (0) target = $region29
    $region28: #{tpu_custom_call.1} parent=1 // pred_region
      _
    $region29: #{tpu_custom_call.1} parent=1 // pred_fallthru
      _
    // Predicated region
    $region30: #{tpu_custom_call.1} parent=1 // pred_check
      _
    $region31: #{tpu_custom_call.1} parent=1 // pred_check_branch
      %54 = sbr.rel (0) target = $region33
    $region32: #{tpu_custom_call.1} parent=1 // pred_region
      %56 = vsyncadd [#allocation6], 0
      %s57 = sshll.u32 %s7, 4
      %s58 = int_to_ptr.hbm [resolvable:$true] %s57
      %s59 = sshll.u32 [#allocation7], 4
      %s60 = int_to_ptr.vmem [resolvable:$true] %s59
      %65 = dma.hbm_to_vmem [thread:$0]  %s58, 512, %s60, [#allocation6], 64, 64, 4
    $region33: #{tpu_custom_call.1} parent=1 // pred_fallthru
      _
    // Predicated region
    $region34: #{tpu_custom_call.1} parent=1 // pred_check
      _
    $region35: #{tpu_custom_call.1} parent=1 // pred_check_branch
      %67 = sbr.rel (0) target = $region37
    $region36: #{tpu_custom_call.1} parent=1 // pred_region
      _
    $region37: #{tpu_custom_call.1} parent=1 // pred_fallthru
      _
    // Predicated region
    $region38: #{tpu_custom_call.1} parent=1 // pred_check
      _
    $region39: #{tpu_custom_call.1} parent=1 // pred_check_branch
      %69 = sbr.rel (0) target = $region41
    $region40: #{tpu_custom_call.1} parent=1 // pred_region
      %71 = dma.done [#allocation3], 8320
    $region41: #{tpu_custom_call.1} parent=1 // pred_fallthru
      _
    // Predicated region
    $region42: #{tpu_custom_call.1} parent=1 // pred_check
      _
    $region43: #{tpu_custom_call.1} parent=1 // pred_check_branch
      %73 = sbr.rel (0) target = $region45
    $region44: #{tpu_custom_call.1} parent=1 // pred_region
      %75 = dma.done [#allocation6], 2048
    $region45: #{tpu_custom_call.1} parent=1 // pred_fallthru
      _
    // Predicated region
    $region46: #{tpu_custom_call.1} parent=1 // pred_check
      _
    $region47: #{tpu_custom_call.1} parent=1 // pred_check_branch
      %77 = sbr.rel (0) target = $region49
    $region48: #{tpu_custom_call.1} parent=1 // pred_region
      %79 = dma.done [#allocation6], 512
    $region49: #{tpu_custom_call.1} parent=1 // pred_fallthru
      _
    %v81 = vld [vmem:[%s0] sm:$0xff]
    %v82 = vld [vmem:[%s0 + $0x8] sm:$0xff]
    %v83 = vld [vmem:[%s0 + $0x10] sm:$0xff]
    %v84 = vld [vmem:[%s0 + $0x18] sm:$0xff]
    %v85 = vld [vmem:[%s0 + $0x20] sm:$0xff]
    %v86 = vld [vmem:[%s0 + $0x28] sm:$0xff]
    %v87 = vld [vmem:[%s0 + $0x30] sm:$0xff]
    %v88 = vld [vmem:[%s0 + $0x38] sm:$0xff]
    %v89 = vld [vmem:[%s0 + $0x40] sm:$0xff]
    %v90 = vld [vmem:[%s0 + $0x48] sm:$0xff]
    %v91 = vpack.c.bf16 %v86, %v81
    %v92 = vpack.c.bf16 %v87, %v82
    %v93 = vpack.c.bf16 %v88, %v83
    %v94 = vpack.c.bf16 %v89, %v84
    %v95 = vpack.c.bf16 %v90, %v85
    %v96 = vld [vmem:[#allocation2] sm:$0xff]
    %v97 = vld [vmem:[#allocation2 + $0x8] sm:$0xff]
    %v98 = vld [vmem:[#allocation2 + $0x10] sm:$0xff]
    %v99 = vld [vmem:[#allocation2 + $0x18] sm:$0xff]
    %v100 = vld [vmem:[#allocation2 + $0x20] sm:$0xff]
    %v101 = vld [vmem:[#allocation2 + $0x28] sm:$0xff]
    %v102 = vld [vmem:[#allocation2 + $0x30] sm:$0xff]
    %v103 = vld [vmem:[#allocation2 + $0x38] sm:$0xff]
    %v104 = vld [vmem:[#allocation2 + $0x40] sm:$0xff]
    %v105 = vld [vmem:[#allocation2 + $0x48] sm:$0xff]
    %v106 = vld [vmem:[#allocation2 + $0x50] sm:$0xff]
    %v107 = vld [vmem:[#allocation2 + $0x58] sm:$0xff]
    %v108 = vld [vmem:[#allocation2 + $0x60] sm:$0xff]
    %v109 = vld [vmem:[#allocation2 + $0x68] sm:$0xff]
    %v110 = vld [vmem:[#allocation2 + $0x70] sm:$0xff]
    %v111 = vld [vmem:[#allocation2 + $0x78] sm:$0xff]
    %v112 = vld [vmem:[#allocation2 + $0x80] sm:$0xff]
    %v113 = vld [vmem:[#allocation2 + $0x88] sm:$0xff]
    %v114 = vld [vmem:[#allocation2 + $0x90] sm:$0xff]
    %v115 = vld [vmem:[#allocation2 + $0x98] sm:$0xff]
    %v116 = vld [vmem:[#allocation2 + $0xa0] sm:$0xff]
    %v117 = vld [vmem:[#allocation2 + $0xa8] sm:$0xff]
    %v118 = vld [vmem:[#allocation2 + $0xb0] sm:$0xff]
    %v119 = vld [vmem:[#allocation2 + $0xb8] sm:$0xff]
    %v120 = vld [vmem:[#allocation2 + $0xc0] sm:$0xff]
    %v121 = vld [vmem:[#allocation2 + $0xc8] sm:$0xff]
    %v122 = vld [vmem:[#allocation2 + $0xd0] sm:$0xff]
    %v123 = vld [vmem:[#allocation2 + $0xd8] sm:$0xff]
    %v124 = vld [vmem:[#allocation2 + $0xe0] sm:$0xff]
    %v125 = vld [vmem:[#allocation2 + $0xe8] sm:$0xff]
    %v126 = vld [vmem:[#allocation2 + $0xf0] sm:$0xff]
    %v127 = vld [vmem:[#allocation2 + $0xf8] sm:$0xff]
    %v128 = vld [vmem:[#allocation2 + $0x100] sm:$0xff]
    %v129 = vld [vmem:[#allocation2 + $0x108] sm:$0xff]
    %v130 = vld [vmem:[#allocation2 + $0x110] sm:$0xff]
    %v131 = vld [vmem:[#allocation2 + $0x118] sm:$0xff]
    %v132 = vld [vmem:[#allocation2 + $0x120] sm:$0xff]
    %v133 = vld [vmem:[#allocation2 + $0x128] sm:$0xff]
    %v134 = vld [vmem:[#allocation2 + $0x130] sm:$0xff]
    %v135 = vld [vmem:[#allocation2 + $0x138] sm:$0xff]
    %v136 = vld [vmem:[#allocation2 + $0x140] sm:$0xff]
    %v137 = vld [vmem:[#allocation2 + $0x148] sm:$0xff]
    %v138 = vld [vmem:[#allocation2 + $0x150] sm:$0xff]
    %v139 = vld [vmem:[#allocation2 + $0x158] sm:$0xff]
    %v140 = vld [vmem:[#allocation2 + $0x160] sm:$0xff]
    %v141 = vld [vmem:[#allocation2 + $0x168] sm:$0xff]
    %v142 = vld [vmem:[#allocation2 + $0x170] sm:$0xff]
    %v143 = vld [vmem:[#allocation2 + $0x178] sm:$0xff]
    %v144 = vld [vmem:[#allocation2 + $0x180] sm:$0xff]
    %v145 = vld [vmem:[#allocation2 + $0x188] sm:$0xff]
    %v146 = vld [vmem:[#allocation2 + $0x190] sm:$0xff]
    %v147 = vld [vmem:[#allocation2 + $0x198] sm:$0xff]
    %v148 = vld [vmem:[#allocation2 + $0x1a0] sm:$0xff]
    %v149 = vld [vmem:[#allocation2 + $0x1a8] sm:$0xff]
    %v150 = vld [vmem:[#allocation2 + $0x1b0] sm:$0xff]
    %v151 = vld [vmem:[#allocation2 + $0x1b8] sm:$0xff]
    %v152 = vld [vmem:[#allocation2 + $0x1c0] sm:$0xff]
    %v153 = vld [vmem:[#allocation2 + $0x1c8] sm:$0xff]
    %v154 = vld [vmem:[#allocation2 + $0x1d0] sm:$0xff]
    %v155 = vld [vmem:[#allocation2 + $0x1d8] sm:$0xff]
    %v156 = vld [vmem:[#allocation2 + $0x1e0] sm:$0xff]
    %v157 = vld [vmem:[#allocation2 + $0x1e8] sm:$0xff]
    %v158 = vld [vmem:[#allocation2 + $0x1f0] sm:$0xff]
    %v159 = vld [vmem:[#allocation2 + $0x1f8] sm:$0xff]
    %v160 = vld [vmem:[#allocation2 + $0x200] sm:$0xff]
    %v161 = vld [vmem:[%s2] sm:$0x3]
    %v163 = vperm.slane %v161, 0
    %v164 = vperm.slane %v161, 1
    %v232 = vunpack.c.l.b16 %v96
    %v233 = vunpack.c.h.b16 %v96
    %v234 = vunpack.c.l.b16 %v97
    %v235 = vunpack.c.h.b16 %v97
    %v236 = vunpack.c.l.b16 %v98
    %v237 = vunpack.c.h.b16 %v98
    %v238 = vunpack.c.l.b16 %v99
    %v239 = vunpack.c.h.b16 %v99
    %v240 = vunpack.c.l.b16 %v100
    %v241 = vunpack.c.h.b16 %v100
    %v242 = vunpack.c.l.b16 %v101
    %v243 = vunpack.c.h.b16 %v101
    %v244 = vunpack.c.l.b16 %v102
    %v245 = vunpack.c.h.b16 %v102
    %v246 = vunpack.c.l.b16 %v103
    %v247 = vunpack.c.h.b16 %v103
    %v248 = vunpack.c.l.b16 %v104
    %v249 = vunpack.c.h.b16 %v104
    %v250 = vunpack.c.l.b16 %v105
    %v251 = vunpack.c.h.b16 %v105
    %v252 = vunpack.c.l.b16 %v106
    %v253 = vunpack.c.h.b16 %v106
    %v254 = vunpack.c.l.b16 %v107
    %v255 = vunpack.c.h.b16 %v107
    %v256 = vunpack.c.l.b16 %v108
    %v257 = vunpack.c.h.b16 %v108
    %v258 = vunpack.c.l.b16 %v109
    %v259 = vunpack.c.h.b16 %v109
    %v260 = vunpack.c.l.b16 %v110
    %v261 = vunpack.c.h.b16 %v110
    %v262 = vunpack.c.l.b16 %v111
    %v263 = vunpack.c.h.b16 %v111
    %v264 = vunpack.c.l.b16 %v112
    %v265 = vunpack.c.h.b16 %v112
    %v266 = vunpack.c.l.b16 %v113
    %v267 = vunpack.c.h.b16 %v113
    %v268 = vunpack.c.l.b16 %v114
    %v269 = vunpack.c.h.b16 %v114
    %v270 = vunpack.c.l.b16 %v115
    %v271 = vunpack.c.h.b16 %v115
    %v272 = vunpack.c.l.b16 %v116
    %v273 = vunpack.c.h.b16 %v116
    %v274 = vunpack.c.l.b16 %v117
    %v275 = vunpack.c.h.b16 %v117
    %v276 = vunpack.c.l.b16 %v118
    %v277 = vunpack.c.h.b16 %v118
    %v278 = vunpack.c.l.b16 %v119
    %v279 = vunpack.c.h.b16 %v119
    %v280 = vunpack.c.l.b16 %v120
    %v281 = vunpack.c.h.b16 %v120
    %v282 = vunpack.c.l.b16 %v121
    %v283 = vunpack.c.h.b16 %v121
    %v284 = vunpack.c.l.b16 %v122
    %v285 = vunpack.c.h.b16 %v122
    %v286 = vunpack.c.l.b16 %v123
    %v287 = vunpack.c.h.b16 %v123
    %v288 = vunpack.c.l.b16 %v124
    %v289 = vunpack.c.h.b16 %v124
    %v290 = vunpack.c.l.b16 %v125
    %v291 = vunpack.c.h.b16 %v125
    %v292 = vunpack.c.l.b16 %v126
    %v293 = vunpack.c.h.b16 %v126
    %v294 = vunpack.c.l.b16 %v127
    %v295 = vunpack.c.h.b16 %v127
    %v296 = vunpack.c.l.b16 %v128
    %v297 = vunpack.c.h.b16 %v128
    %v298 = vunpack.c.l.b16 %v129
    %v299 = vunpack.c.h.b16 %v129
    %v300 = vunpack.c.l.b16 %v130
    %v301 = vunpack.c.h.b16 %v130
    %v302 = vunpack.c.l.b16 %v131
    %v303 = vunpack.c.h.b16 %v131
    %v304 = vunpack.c.l.b16 %v132
    %v305 = vunpack.c.h.b16 %v132
    %v306 = vunpack.c.l.b16 %v133
    %v307 = vunpack.c.h.b16 %v133
    %v308 = vunpack.c.l.b16 %v134
    %v309 = vunpack.c.h.b16 %v134
    %v310 = vunpack.c.l.b16 %v135
    %v311 = vunpack.c.h.b16 %v135
    %v312 = vunpack.c.l.b16 %v136
    %v313 = vunpack.c.h.b16 %v136
    %v314 = vunpack.c.l.b16 %v137
    %v315 = vunpack.c.h.b16 %v137
    %v316 = vunpack.c.l.b16 %v138
    %v317 = vunpack.c.h.b16 %v138
    %v318 = vunpack.c.l.b16 %v139
    %v319 = vunpack.c.h.b16 %v139
    %v320 = vunpack.c.l.b16 %v140
    %v321 = vunpack.c.h.b16 %v140
    %v322 = vunpack.c.l.b16 %v141
    %v323 = vunpack.c.h.b16 %v141
    %v324 = vunpack.c.l.b16 %v142
    %v325 = vunpack.c.h.b16 %v142
    %v326 = vunpack.c.l.b16 %v143
    %v327 = vunpack.c.h.b16 %v143
    %v328 = vunpack.c.l.b16 %v144
    %v329 = vunpack.c.h.b16 %v144
    %v330 = vunpack.c.l.b16 %v145
    %v331 = vunpack.c.h.b16 %v145
    %v332 = vunpack.c.l.b16 %v146
    %v333 = vunpack.c.h.b16 %v146
    %v334 = vunpack.c.l.b16 %v147
    %v335 = vunpack.c.h.b16 %v147
    %v336 = vunpack.c.l.b16 %v148
    %v337 = vunpack.c.h.b16 %v148
    %v338 = vunpack.c.l.b16 %v149
    %v339 = vunpack.c.h.b16 %v149
    %v340 = vunpack.c.l.b16 %v150
    %v341 = vunpack.c.h.b16 %v150
    %v342 = vunpack.c.l.b16 %v151
    %v343 = vunpack.c.h.b16 %v151
    %v344 = vunpack.c.l.b16 %v152
    %v345 = vunpack.c.h.b16 %v152
    %v346 = vunpack.c.l.b16 %v153
    %v347 = vunpack.c.h.b16 %v153
    %v348 = vunpack.c.l.b16 %v154
    %v349 = vunpack.c.h.b16 %v154
    %v350 = vunpack.c.l.b16 %v155
    %v351 = vunpack.c.h.b16 %v155
    %v352 = vunpack.c.l.b16 %v156
    %v353 = vunpack.c.h.b16 %v156
    %v354 = vunpack.c.l.b16 %v157
    %v355 = vunpack.c.h.b16 %v157
    %v356 = vunpack.c.l.b16 %v158
    %v357 = vunpack.c.h.b16 %v158
    %v358 = vunpack.c.l.b16 %v159
    %v359 = vunpack.c.h.b16 %v159
    %v360 = vunpack.c.l.b16 %v160
    %v361 = vunpack.c.h.b16 %v160
    %v362 = vpack.c.b16 %v234, %v232
    %v363 = vpack.c.b16 %v235, %v233
    %v364 = vpack.c.b16 %v238, %v236
    %v365 = vpack.c.b16 %v239, %v237
    %v366 = vpack.c.b16 %v242, %v240
    %v367 = vpack.c.b16 %v243, %v241
    %v368 = vpack.c.b16 %v246, %v244
    %v369 = vpack.c.b16 %v247, %v245
    %v370 = vpack.c.b16 %v250, %v248
    %v371 = vpack.c.b16 %v251, %v249
    %v372 = vpack.c.b16 %v254, %v252
    %v373 = vpack.c.b16 %v255, %v253
    %v374 = vpack.c.b16 %v258, %v256
    %v375 = vpack.c.b16 %v259, %v257
    %v376 = vpack.c.b16 %v262, %v260
    %v377 = vpack.c.b16 %v263, %v261
    %v378 = vpack.c.b16 %v266, %v264
    %v379 = vpack.c.b16 %v267, %v265
    %v380 = vpack.c.b16 %v270, %v268
    %v381 = vpack.c.b16 %v271, %v269
    %v382 = vpack.c.b16 %v274, %v272
    %v383 = vpack.c.b16 %v275, %v273
    %v384 = vpack.c.b16 %v278, %v276
    %v385 = vpack.c.b16 %v279, %v277
    %v386 = vpack.c.b16 %v282, %v280
    %v387 = vpack.c.b16 %v283, %v281
    %v388 = vpack.c.b16 %v286, %v284
    %v389 = vpack.c.b16 %v287, %v285
    %v390 = vpack.c.b16 %v290, %v288
    %v391 = vpack.c.b16 %v291, %v289
    %v392 = vpack.c.b16 %v294, %v292
    %v393 = vpack.c.b16 %v295, %v293
    %v394 = vpack.c.b16 %v298, %v296
    %v395 = vpack.c.b16 %v299, %v297
    %v396 = vpack.c.b16 %v302, %v300
    %v397 = vpack.c.b16 %v303, %v301
    %v398 = vpack.c.b16 %v306, %v304
    %v399 = vpack.c.b16 %v307, %v305
    %v400 = vpack.c.b16 %v310, %v308
    %v401 = vpack.c.b16 %v311, %v309
    %v402 = vpack.c.b16 %v314, %v312
    %v403 = vpack.c.b16 %v315, %v313
    %v404 = vpack.c.b16 %v318, %v316
    %v405 = vpack.c.b16 %v319, %v317
    %v406 = vpack.c.b16 %v322, %v320
    %v407 = vpack.c.b16 %v323, %v321
    %v408 = vpack.c.b16 %v326, %v324
    %v409 = vpack.c.b16 %v327, %v325
    %v410 = vpack.c.b16 %v330, %v328
    %v411 = vpack.c.b16 %v331, %v329
    %v412 = vpack.c.b16 %v334, %v332
    %v413 = vpack.c.b16 %v335, %v333
    %v414 = vpack.c.b16 %v338, %v336
    %v415 = vpack.c.b16 %v339, %v337
    %v416 = vpack.c.b16 %v342, %v340
    %v417 = vpack.c.b16 %v343, %v341
    %v418 = vpack.c.b16 %v346, %v344
    %v419 = vpack.c.b16 %v347, %v345
    %v420 = vpack.c.b16 %v350, %v348
    %v421 = vpack.c.b16 %v351, %v349
    %v422 = vpack.c.b16 %v354, %v352
    %v423 = vpack.c.b16 %v355, %v353
    %v424 = vpack.c.b16 %v358, %v356
    %v425 = vpack.c.b16 %v359, %v357
    %v426 = vpack.c.b16 %v360, %v360
    %v427 = vpack.c.b16 %v361, %v361
    %vm492 = vcmask 64512
    %v494 = vsel %vm492, %v95, 0
    %vm496 = vcmask 1043456
    %v498 = vsel %vm496, %v426, 0
    %v501 = vsel %vm496, %v427, 0
    %503 = vmatpush.bf16.msra.mxu0 %v376
    %504 = vmatpush.bf16.msra.mxu0 %v374
    %505 = vmatpush.bf16.msra.mxu0 %v372
    %506 = vmatpush.bf16.msra.mxu0 %v370
    %507 = vmatpush.bf16.msra.mxu0 %v368
    %508 = vmatpush.bf16.msra.mxu0 %v366
    %509 = vmatpush.bf16.msra.mxu0 %v364
    %510 = vmatpush.bf16.msra.mxu0 %v362
    %511 = vmatmul.bf16.gmra.mxu0 %v91
    %v512 = vpop.f32.mrf.mxu0
    %v513 = vadd.f32 %v163, %v512
    %v514 = vpop.f32.mrf.mxu0
    %v515 = vadd.f32 %v163, %v514
    %516 = vdwg.mxu0
    %517 = vmatpush.bf16.msra.mxu0 %v392
    %518 = vmatpush.bf16.msra.mxu0 %v390
    %519 = vmatpush.bf16.msra.mxu0 %v388
    %520 = vmatpush.bf16.msra.mxu0 %v386
    %521 = vmatpush.bf16.msra.mxu0 %v384
    %522 = vmatpush.bf16.msra.mxu0 %v382
    %523 = vmatpush.bf16.msra.mxu0 %v380
    %524 = vmatpush.bf16.msra.mxu0 %v378
    %525 = vmatmul.bf16.gmra.mxu0 %v92
    %v526 = vpop.f32.mrf.mxu0
    %v527 = vadd.f32 %v513, %v526
    %v528 = vpop.f32.mrf.mxu0
    %v529 = vadd.f32 %v515, %v528
    %530 = vdwg.mxu0
    %531 = vmatpush.bf16.msra.mxu0 %v408
    %532 = vmatpush.bf16.msra.mxu0 %v406
    %533 = vmatpush.bf16.msra.mxu0 %v404
    %534 = vmatpush.bf16.msra.mxu0 %v402
    %535 = vmatpush.bf16.msra.mxu0 %v400
    %536 = vmatpush.bf16.msra.mxu0 %v398
    %537 = vmatpush.bf16.msra.mxu0 %v396
    %538 = vmatpush.bf16.msra.mxu0 %v394
    %539 = vmatmul.bf16.gmra.mxu0 %v93
    %v540 = vpop.f32.mrf.mxu0
    %v541 = vadd.f32 %v527, %v540
    %v542 = vpop.f32.mrf.mxu0
    %v543 = vadd.f32 %v529, %v542
    %544 = vdwg.mxu0
    %545 = vmatpush.bf16.msra.mxu0 %v424
    %546 = vmatpush.bf16.msra.mxu0 %v422
    %547 = vmatpush.bf16.msra.mxu0 %v420
    %548 = vmatpush.bf16.msra.mxu0 %v418
    %549 = vmatpush.bf16.msra.mxu0 %v416
    %550 = vmatpush.bf16.msra.mxu0 %v414
    %551 = vmatpush.bf16.msra.mxu0 %v412
    %552 = vmatpush.bf16.msra.mxu0 %v410
    %553 = vmatmul.bf16.gmra.mxu0 %v94
    %v554 = vpop.f32.mrf.mxu0
    %v555 = vadd.f32 %v541, %v554
    %v556 = vpop.f32.mrf.mxu0
    %v557 = vadd.f32 %v543, %v556
    %558 = vdwg.mxu0
    %559 = vmatpush.bf16.msra.mxu0 0
    %560 = vmatpush.bf16.msra.mxu0 0
    %561 = vmatpush.bf16.msra.mxu0 0
    %562 = vmatpush.bf16.msra.mxu0 0
    %563 = vmatpush.bf16.msra.mxu0 0
    %564 = vmatpush.bf16.msra.mxu0 0
    %565 = vmatpush.bf16.msra.mxu0 0
    %566 = vmatpush.bf16.msra.mxu0 %v498
    %567 = vmatmul.bf16.gmra.mxu0 %v494
    %v568 = vpop.f32.mrf.mxu0
    %v569 = vadd.f32 %v555, %v568
    %v570 = vpop.f32.mrf.mxu0
    %v571 = vadd.f32 %v557, %v570
    %572 = vdwg.mxu0
    %573 = vmatpush.bf16.msra.mxu0 %v377
    %574 = vmatpush.bf16.msra.mxu0 %v375
    %575 = vmatpush.bf16.msra.mxu0 %v373
    %576 = vmatpush.bf16.msra.mxu0 %v371
    %577 = vmatpush.bf16.msra.mxu0 %v369
    %578 = vmatpush.bf16.msra.mxu0 %v367
    %579 = vmatpush.bf16.msra.mxu0 %v365
    %580 = vmatpush.bf16.msra.mxu0 %v363
    %581 = vmatmul.bf16.gmra.mxu0 %v91
    %v582 = vpop.f32.mrf.mxu0
    %v583 = vadd.f32 %v164, %v582
    %v584 = vpop.f32.mrf.mxu0
    %v585 = vadd.f32 %v164, %v584
    %586 = vdwg.mxu0
    %587 = vmatpush.bf16.msra.mxu0 %v393
    %588 = vmatpush.bf16.msra.mxu0 %v391
    %589 = vmatpush.bf16.msra.mxu0 %v389
    %590 = vmatpush.bf16.msra.mxu0 %v387
    %591 = vmatpush.bf16.msra.mxu0 %v385
    %592 = vmatpush.bf16.msra.mxu0 %v383
    %593 = vmatpush.bf16.msra.mxu0 %v381
    %594 = vmatpush.bf16.msra.mxu0 %v379
    %595 = vmatmul.bf16.gmra.mxu0 %v92
    %v596 = vpop.f32.mrf.mxu0
    %v597 = vadd.f32 %v583, %v596
    %v598 = vpop.f32.mrf.mxu0
    %v599 = vadd.f32 %v585, %v598
    %600 = vdwg.mxu0
    %601 = vmatpush.bf16.msra.mxu0 %v409
    %602 = vmatpush.bf16.msra.mxu0 %v407
    %603 = vmatpush.bf16.msra.mxu0 %v405
    %604 = vmatpush.bf16.msra.mxu0 %v403
    %605 = vmatpush.bf16.msra.mxu0 %v401
    %606 = vmatpush.bf16.msra.mxu0 %v399
    %607 = vmatpush.bf16.msra.mxu0 %v397
    %608 = vmatpush.bf16.msra.mxu0 %v395
    %609 = vmatmul.bf16.gmra.mxu0 %v93
    %v610 = vpop.f32.mrf.mxu0
    %v611 = vadd.f32 %v597, %v610
    %v612 = vpop.f32.mrf.mxu0
    %v613 = vadd.f32 %v599, %v612
    %614 = vdwg.mxu0
    %615 = vmatpush.bf16.msra.mxu0 %v425
    %616 = vmatpush.bf16.msra.mxu0 %v423
    %617 = vmatpush.bf16.msra.mxu0 %v421
    %618 = vmatpush.bf16.msra.mxu0 %v419
    %619 = vmatpush.bf16.msra.mxu0 %v417
    %620 = vmatpush.bf16.msra.mxu0 %v415
    %621 = vmatpush.bf16.msra.mxu0 %v413
    %622 = vmatpush.bf16.msra.mxu0 %v411
    %623 = vmatmul.bf16.gmra.mxu0 %v94
    %v624 = vpop.f32.mrf.mxu0
    %v625 = vadd.f32 %v611, %v624
    %v626 = vpop.f32.mrf.mxu0
    %v627 = vadd.f32 %v613, %v626
    %628 = vdwg.mxu0
    %629 = vmatpush.bf16.msra.mxu0 0
    %630 = vmatpush.bf16.msra.mxu0 0
    %631 = vmatpush.bf16.msra.mxu0 0
    %632 = vmatpush.bf16.msra.mxu0 0
    %633 = vmatpush.bf16.msra.mxu0 0
    %634 = vmatpush.bf16.msra.mxu0 0
    %635 = vmatpush.bf16.msra.mxu0 0
    %636 = vmatpush.bf16.msra.mxu0 %v501
    %637 = vmatmul.bf16.gmra.mxu0 %v494
    %v638 = vpop.f32.mrf.mxu0
    %v639 = vadd.f32 %v625, %v638
    %v640 = vpop.f32.mrf.mxu0
    %v641 = vadd.f32 %v627, %v640
    %642 = vdwg.mxu0
    %v643 = vmax.f32 %v569, 0.0
    %v644 = vmax.f32 %v639, 0.0
    %v645 = vmax.f32 %v571, 0.0
    %v646 = vmax.f32 %v641, 0.0
    %v647 = vpack.c.bf16 %v645, %v643
    %v648 = vpack.c.bf16 %v646, %v644
    %v649 = vld [vmem:[#allocation5] sm:$0xf]
    %v650 = vld [vmem:[#allocation5 + $0x4] sm:$0xf]
    %v651 = vld [vmem:[#allocation5 + $0x8] sm:$0xf]
    %v652 = vld [vmem:[#allocation5 + $0xc] sm:$0xf]
    %v653 = vld [vmem:[#allocation5 + $0x10] sm:$0xf]
    %v654 = vld [vmem:[#allocation5 + $0x14] sm:$0xf]
    %v655 = vld [vmem:[#allocation5 + $0x18] sm:$0xf]
    %v656 = vld [vmem:[#allocation5 + $0x1c] sm:$0xf]
    %v657 = vld [vmem:[#allocation5 + $0x20] sm:$0xf]
    %v658 = vld [vmem:[#allocation5 + $0x24] sm:$0xf]
    %v659 = vld [vmem:[#allocation5 + $0x28] sm:$0xf]
    %v660 = vld [vmem:[#allocation5 + $0x2c] sm:$0xf]
    %v661 = vld [vmem:[#allocation5 + $0x30] sm:$0xf]
    %v662 = vld [vmem:[#allocation5 + $0x34] sm:$0xf]
    %v663 = vld [vmem:[#allocation5 + $0x38] sm:$0xf]
    %v664 = vld [vmem:[#allocation5 + $0x3c] sm:$0xf]
    %v665 = vld [vmem:[#allocation5 + $0x40] sm:$0xf]
    %v666 = vld [vmem:[#allocation5 + $0x44] sm:$0xf]
    %v667 = vld [vmem:[#allocation5 + $0x48] sm:$0xf]
    %v668 = vld [vmem:[#allocation5 + $0x4c] sm:$0xf]
    %v669 = vld [vmem:[#allocation5 + $0x50] sm:$0xf]
    %v670 = vld [vmem:[#allocation5 + $0x54] sm:$0xf]
    %v671 = vld [vmem:[#allocation5 + $0x58] sm:$0xf]
    %v672 = vld [vmem:[#allocation5 + $0x5c] sm:$0xf]
    %v673 = vld [vmem:[#allocation5 + $0x60] sm:$0xf]
    %v674 = vld [vmem:[#allocation5 + $0x64] sm:$0xf]
    %v675 = vld [vmem:[#allocation5 + $0x68] sm:$0xf]
    %v676 = vld [vmem:[#allocation5 + $0x6c] sm:$0xf]
    %v677 = vld [vmem:[#allocation5 + $0x70] sm:$0xf]
    %v678 = vld [vmem:[#allocation5 + $0x74] sm:$0xf]
    %v679 = vld [vmem:[#allocation5 + $0x78] sm:$0xf]
    %v680 = vld [vmem:[#allocation5 + $0x7c] sm:$0xf]
    %v681 = vld [vmem:[%s4] sm:$0x1]
    %v683 = vperm.slane %v681, 0
    %v717 = vunpack.c.l.b16 %v649
    %v718 = vunpack.c.l.b16 %v650
    %v719 = vunpack.c.l.b16 %v651
    %v720 = vunpack.c.l.b16 %v652
    %v721 = vunpack.c.l.b16 %v653
    %v722 = vunpack.c.l.b16 %v654
    %v723 = vunpack.c.l.b16 %v655
    %v724 = vunpack.c.l.b16 %v656
    %v725 = vunpack.c.l.b16 %v657
    %v726 = vunpack.c.l.b16 %v658
    %v727 = vunpack.c.l.b16 %v659
    %v728 = vunpack.c.l.b16 %v660
    %v729 = vunpack.c.l.b16 %v661
    %v730 = vunpack.c.l.b16 %v662
    %v731 = vunpack.c.l.b16 %v663
    %v732 = vunpack.c.l.b16 %v664
    %v733 = vunpack.c.l.b16 %v665
    %v734 = vunpack.c.l.b16 %v666
    %v735 = vunpack.c.l.b16 %v667
    %v736 = vunpack.c.l.b16 %v668
    %v737 = vunpack.c.l.b16 %v669
    %v738 = vunpack.c.l.b16 %v670
    %v739 = vunpack.c.l.b16 %v671
    %v740 = vunpack.c.l.b16 %v672
    %v741 = vunpack.c.l.b16 %v673
    %v742 = vunpack.c.l.b16 %v674
    %v743 = vunpack.c.l.b16 %v675
    %v744 = vunpack.c.l.b16 %v676
    %v745 = vunpack.c.l.b16 %v677
    %v746 = vunpack.c.l.b16 %v678
    %v747 = vunpack.c.l.b16 %v679
    %v748 = vunpack.c.l.b16 %v680
    %v749 = vpack.c.b16 %v718, %v717
    %v750 = vpack.c.b16 %v720, %v719
    %v751 = vpack.c.b16 %v722, %v721
    %v752 = vpack.c.b16 %v724, %v723
    %v753 = vpack.c.b16 %v726, %v725
    %v754 = vpack.c.b16 %v728, %v727
    %v755 = vpack.c.b16 %v730, %v729
    %v756 = vpack.c.b16 %v732, %v731
    %v757 = vpack.c.b16 %v734, %v733
    %v758 = vpack.c.b16 %v736, %v735
    %v759 = vpack.c.b16 %v738, %v737
    %v760 = vpack.c.b16 %v740, %v739
    %v761 = vpack.c.b16 %v742, %v741
    %v762 = vpack.c.b16 %v744, %v743
    %v763 = vpack.c.b16 %v746, %v745
    %v764 = vpack.c.b16 %v748, %v747
    %781 = vmatpush.bf16.msra.mxu0 %v756
    %782 = vmatpush.bf16.msra.mxu0 %v755
    %783 = vmatpush.bf16.msra.mxu0 %v754
    %784 = vmatpush.bf16.msra.mxu0 %v753
    %785 = vmatpush.bf16.msra.mxu0 %v752
    %786 = vmatpush.bf16.msra.mxu0 %v751
    %787 = vmatpush.bf16.msra.mxu0 %v750
    %788 = vmatpush.bf16.msra.mxu0 %v749
    %789 = vmatmul.bf16.gmra.mxu0 %v647
    %v790 = vpop.f32.mrf.mxu0
    %v791 = vadd.f32 %v683, %v790
    %v792 = vpop.f32.mrf.mxu0
    %v793 = vadd.f32 %v683, %v792
    %794 = vdwg.mxu0
    %795 = vmatpush.bf16.msra.mxu0 %v764
    %796 = vmatpush.bf16.msra.mxu0 %v763
    %797 = vmatpush.bf16.msra.mxu0 %v762
    %798 = vmatpush.bf16.msra.mxu0 %v761
    %799 = vmatpush.bf16.msra.mxu0 %v760
    %800 = vmatpush.bf16.msra.mxu0 %v759
    %801 = vmatpush.bf16.msra.mxu0 %v758
    %802 = vmatpush.bf16.msra.mxu0 %v757
    %803 = vmatmul.bf16.gmra.mxu0 %v648
    %v804 = vpop.f32.mrf.mxu0
    %v805 = vadd.f32 %v791, %v804
    %v806 = vpop.f32.mrf.mxu0
    %v807 = vadd.f32 %v793, %v806
    %808 = vdwg.mxu0
    %v809 = vmax.f32 %v805, 0.0
    %v810 = vmax.f32 %v807, 0.0
    %v811 = vpack.c.bf16 %v810, %v809
    %v812 = vld [vmem:[%s5] sm:$0xf]
    %v813 = vld [vmem:[%s5 + $0x4] sm:$0xf]
    %v814 = vld [vmem:[%s5 + $0x8] sm:$0xf]
    %v815 = vld [vmem:[%s5 + $0xc] sm:$0xf]
    %v816 = vld [vmem:[%s5 + $0x10] sm:$0xf]
    %v817 = vld [vmem:[%s5 + $0x14] sm:$0xf]
    %v818 = vld [vmem:[%s5 + $0x18] sm:$0xf]
    %v819 = vld [vmem:[%s5 + $0x1c] sm:$0xf]
    %v820 = vld [vmem:[%s5 + $0x20] sm:$0xf]
    %v821 = vld [vmem:[%s5 + $0x24] sm:$0xf]
    %v822 = vld [vmem:[%s5 + $0x28] sm:$0xf]
    %v823 = vld [vmem:[%s5 + $0x2c] sm:$0xf]
    %v824 = vld [vmem:[%s5 + $0x30] sm:$0xf]
    %v825 = vld [vmem:[%s5 + $0x34] sm:$0xf]
    %v826 = vld [vmem:[%s5 + $0x38] sm:$0xf]
    %v827 = vld [vmem:[%s5 + $0x3c] sm:$0xf]
    %v828 = vld [vmem:[%s6] sm:$0x1]
    %v830 = vperm.slane %v828, 0
    %v848 = vunpack.c.l.b16 %v812
    %v849 = vunpack.c.l.b16 %v813
    %v850 = vunpack.c.l.b16 %v814
    %v851 = vunpack.c.l.b16 %v815
    %v852 = vunpack.c.l.b16 %v816
    %v853 = vunpack.c.l.b16 %v817
    %v854 = vunpack.c.l.b16 %v818
    %v855 = vunpack.c.l.b16 %v819
    %v856 = vunpack.c.l.b16 %v820
    %v857 = vunpack.c.l.b16 %v821
    %v858 = vunpack.c.l.b16 %v822
    %v859 = vunpack.c.l.b16 %v823
    %v860 = vunpack.c.l.b16 %v824
    %v861 = vunpack.c.l.b16 %v825
    %v862 = vunpack.c.l.b16 %v826
    %v863 = vunpack.c.l.b16 %v827
    %v864 = vpack.c.b16 %v849, %v848
    %v865 = vpack.c.b16 %v851, %v850
    %v866 = vpack.c.b16 %v853, %v852
    %v867 = vpack.c.b16 %v855, %v854
    %v868 = vpack.c.b16 %v857, %v856
    %v869 = vpack.c.b16 %v859, %v858
    %v870 = vpack.c.b16 %v861, %v860
    %v871 = vpack.c.b16 %v863, %v862
    %880 = vmatpush.bf16.msra.mxu0 %v871
    %881 = vmatpush.bf16.msra.mxu0 %v870
    %882 = vmatpush.bf16.msra.mxu0 %v869
    %883 = vmatpush.bf16.msra.mxu0 %v868
    %884 = vmatpush.bf16.msra.mxu0 %v867
    %885 = vmatpush.bf16.msra.mxu0 %v866
    %886 = vmatpush.bf16.msra.mxu0 %v865
    %887 = vmatpush.bf16.msra.mxu0 %v864
    %888 = vmatmul.bf16.gmra.mxu0 %v811
    %v889 = vpop.f32.mrf.mxu0
    %v890 = vadd.f32 %v830, %v889
    %v891 = vpop.f32.mrf.mxu0
    %v892 = vadd.f32 %v830, %v891
    %893 = vdwg.mxu0
    %v894 = vmax.f32 %v890, 0.0
    %v895 = vmax.f32 %v892, 0.0
    %v896 = vpack.c.bf16 %v895, %v894
    %v897 = vld [vmem:[#allocation7] sm:$0xf]
    %v898 = vld [vmem:[#allocation7 + $0x4] sm:$0xf]
    %v899 = vld [vmem:[#allocation7 + $0x8] sm:$0xf]
    %v900 = vld [vmem:[#allocation7 + $0xc] sm:$0xf]
    %v901 = vld [vmem:[#allocation7 + $0x10] sm:$0xf]
    %v902 = vld [vmem:[#allocation7 + $0x14] sm:$0xf]
    %v903 = vld [vmem:[#allocation7 + $0x18] sm:$0xf]
    %v904 = vld [vmem:[#allocation7 + $0x1c] sm:$0xf]
    %v905 = vld [vmem:[%s8] sm:$0x1]
    %v907 = vperm.slane %v905, 0
    %v917 = vunpack.c.l.b16 %v897
    %v918 = vunpack.c.l.b16 %v898
    %v919 = vunpack.c.l.b16 %v899
    %v920 = vunpack.c.l.b16 %v900
    %v921 = vunpack.c.l.b16 %v901
    %v922 = vunpack.c.l.b16 %v902
    %v923 = vunpack.c.l.b16 %v903
    %v924 = vunpack.c.l.b16 %v904
    %v925 = vpack.c.b16 %v918, %v917
    %v926 = vpack.c.b16 %v920, %v919
    %v927 = vpack.c.b16 %v922, %v921
    %v928 = vpack.c.b16 %v924, %v923
    %vm933 = vcmask 523264
    %v935 = vsel %vm933, %v896, 0
    %937 = vmatpush.bf16.msra.mxu0 0
    %938 = vmatpush.bf16.msra.mxu0 0
    %939 = vmatpush.bf16.msra.mxu0 0
    %940 = vmatpush.bf16.msra.mxu0 0
    %941 = vmatpush.bf16.msra.mxu0 %v928
    %942 = vmatpush.bf16.msra.mxu0 %v927
    %943 = vmatpush.bf16.msra.mxu0 %v926
    %944 = vmatpush.bf16.msra.mxu0 %v925
    %945 = vmatmul.bf16.gmra.mxu0 %v935
    %v946 = vpop.f32.mrf.mxu0
    %v947 = vadd.f32 %v907, %v946
    %v948 = vpop.f32.mrf.mxu0
    %v949 = vadd.f32 %v907, %v948
    %950 = vdwg.mxu0
    %v951 = vpack.c.bf16 %v947, %v947
    %v952 = vpack.c.bf16 %v949, %v949
    %953 = vst [vmem:[#allocation8] sm:$0xf] %v951
    %954 = vst [vmem:[#allocation8 + $0x4] sm:$0xf] %v952
    // Predicated region
    $region50: #{tpu_custom_call.1} parent=1 // pred_check
      _
    $region51: #{tpu_custom_call.1} parent=1 // pred_check_branch
      %956 = sbr.rel (0) target = $region53
    $region52: #{tpu_custom_call.1} parent=1 // pred_region
      %958 = vsyncadd [#allocation4], 0
      %s959 = sshll.u32 [#allocation8], 4
      %s960 = int_to_ptr.vmem [resolvable:$true] %s959
      %s961 = sshll.u32 %s9, 4
      %s962 = int_to_ptr.hbm [resolvable:$true] %s961
      %967 = dma.vmem_to_hbm [thread:$0]  %s960, 128, %s962, [#allocation4], 64, 64, 4
    $region53: #{tpu_custom_call.1} parent=1 // pred_fallthru
      _
    // Predicated region
    $region54: #{tpu_custom_call.1} parent=1 // pred_check
      _
    $region55: #{tpu_custom_call.1} parent=1 // pred_check_branch
      %969 = sbr.rel (0) target = $region57
    $region56: #{tpu_custom_call.1} parent=1 // pred_region
      %971 = dma.done [#allocation4], 128
    $region57: #{tpu_custom_call.1} parent=1 // pred_fallthru
      _
    %972 = vsyncpa [#allocation3], 1
    %973 = vsyncpa [#allocation6], 1
    %974 = vsyncpa [#allocation4], 1

</llo_original>
